<compile_context>
chip_gen: v6e
topology: v6e:2x2x1
jax: 0.10.0
libtpu: 0.0.40
codegen_flags: <defaults>
</compile_context>

<pallas_src>
import math
from functools import partial

import jax
import jax.numpy as jnp
from jax.experimental import pallas as pl
from jax.experimental.pallas import tpu as pltpu


LANE = 128  # lane (last-dim) granularity


def _round_up(n: int, m: int) -> int:
    return ((n + m - 1) // m) * m


def _sublane_rows(dtype) -> int:
    # minimum second-to-last-dim granularity per dtype packing
    return {4: 8, 2: 16, 1: 32}[jnp.dtype(dtype).itemsize]


def _choose_batch_tile(B: int, sublane: int) -> int:
    if B <= 256:
        return max(sublane, _round_up(B, sublane))          # single grid step
    if B <= 1024:
        return _round_up(-(-B // 2), sublane)                # >=2 steps (v7x: 2 TCs)
    return 512                                               # large-B sweet spot


def _const_spec(shape):
    """Grid-invariant block; single-buffered to halve resident weight VMEM."""
    try:
        return pl.BlockSpec(shape, lambda i: (0, 0), pipeline_mode=pl.Buffered(1))
    except TypeError:  # older pallas without pipeline_mode kwarg
        return pl.BlockSpec(shape, lambda i: (0, 0))


# --------------------------------------------------------------------------- kernel

def _mlp_kernel(*refs, num_layers: int, compute_dtype):
    # refs = (x_ref, w0, b0, w1, b1, ..., wL, bL, o_ref)
    x_ref = refs[0]
    o_ref = refs[-1]
    params = refs[1:-1]

    h = x_ref[...]  # compute_dtype; scale factor folded into W0 at prepare time
    for i in range(num_layers):
        w = params[2 * i][...]
        b = params[2 * i + 1][...]  # f32 bias, added on the f32 accumulator
        acc = jnp.dot(h, w, preferred_element_type=jnp.float32) + b
        if i < num_layers - 1:
            acc = jnp.maximum(acc, 0.0)       # ReLU on the f32 accumulator
            h = acc.astype(compute_dtype)     # feed next matmul in compute dtype
        else:
            h = acc
    o_ref[...] = h.astype(o_ref.dtype)


# --------------------------------------------------------------------------- wrapper

def prepare_params(weights, biases, factor=1.0, compute_dtype=jnp.bfloat16):
    """One-time padding/casting of parameters (hoisted out of the per-call path).

    weights[i]: [d_in_i, d_out_i] (transpose of PyTorch's [out, in]); biases[i]: [*, d_out_i].
    Returns (dims, dims_pad, flat_params) with flat_params = (w0,b0,w1,b1,...),
    weights zero-padded to 128-multiples and cast to compute_dtype (factor folded into W0),
    biases zero-padded and kept in float32.
    """
    num_layers = len(weights)
    dims = tuple([weights[0].shape[0]] + [w.shape[1] for w in weights])
    dims_pad = tuple(_round_up(d, LANE) for d in dims)

    flat = []
    for li in range(num_layers):
        w = jnp.asarray(weights[li], jnp.float32)
        b = jnp.asarray(biases[li], jnp.float32)
        d_in, d_out = w.shape
        d_in_p, d_out_p = dims_pad[li], dims_pad[li + 1]
        if li == 0:
            w = w * jnp.float32(factor)  # (f*x) @ W0 == x @ (f*W0)
        w_p = jnp.zeros((d_in_p, d_out_p), compute_dtype).at[:d_in, :d_out].set(
            w.astype(compute_dtype))
        b_p = jnp.zeros((1, d_out_p), jnp.float32).at[:, :d_out].set(
            b.reshape(1, d_out))
        flat += [w_p, b_p]
    return dims, dims_pad, tuple(flat)


def _forward_impl(x, *flat_params, num_layers, dims, dims_pad, compute_dtype,
                  batch_tile=None):
    B, in_dim = x.shape
    assert in_dim == dims[0], f"expected in_dim={dims[0]}, got {in_dim}"
    out_dim, out_dim_p = dims[-1], dims_pad[-1]
    in_dim_p = dims_pad[0]
    out_dtype = x.dtype

    sublane = _sublane_rows(compute_dtype)
    if batch_tile is None:
        batch_tile = _choose_batch_tile(B, sublane)
    batch_tile = max(sublane, _round_up(batch_tile, sublane))
    B_pad = _round_up(B, batch_tile)

    # Pad/cast input only when necessary.
    if (B_pad, in_dim_p) == (B, in_dim) and x.dtype == compute_dtype:
        x_p = x
    elif (B_pad, in_dim_p) == (B, in_dim):
        x_p = x.astype(compute_dtype)
    else:
        x_p = jnp.zeros((B_pad, in_dim_p), compute_dtype).at[:B, :in_dim].set(
            x.astype(compute_dtype))

    in_specs = [pl.BlockSpec((batch_tile, in_dim_p), lambda i: (i, 0))]
    for li in range(num_layers):
        d_in_p, d_out_p = dims_pad[li], dims_pad[li + 1]
        in_specs.append(_const_spec((d_in_p, d_out_p)))
        in_specs.append(_const_spec((1, d_out_p)))
    out_spec = pl.BlockSpec((batch_tile, out_dim_p), lambda i: (i, 0))

    # Explicit VMEM budget (v5e scoped default 16 MiB, v7x 32 MiB of 64 MiB physical).
    c_bytes = jnp.dtype(compute_dtype).itemsize
    w_bytes = sum(dims_pad[l] * dims_pad[l + 1] for l in range(num_layers)) * c_bytes
    b_bytes = sum(dims_pad[l + 1] for l in range(num_layers)) * 4
    io_bytes = 2 * batch_tile * (in_dim_p * c_bytes
                                 + out_dim_p * jnp.dtype(out_dtype).itemsize)
    est = w_bytes + b_bytes + io_bytes
    vmem_limit = int(min(max(2 * est + (2 << 20), 8 << 20), 60 << 20))

    kernel = partial(_mlp_kernel, num_layers=num_layers, compute_dtype=compute_dtype)
    out_padded = pl.pallas_call(
        kernel,
        out_shape=jax.ShapeDtypeStruct((B_pad, out_dim_p), out_dtype),
        grid_spec=pltpu.PrefetchScalarGridSpec(
            num_scalar_prefetch=0,
            grid=(B_pad // batch_tile,),
            in_specs=in_specs,
            out_specs=out_spec,
        ),
        compiler_params=pltpu.CompilerParams(
            dimension_semantics=("parallel",),
            vmem_limit_bytes=vmem_limit),
    )(x_p, *flat_params)

    if (B_pad, out_dim_p) == (B, out_dim):
        return out_padded
    return out_padded[:B, :out_dim]


class BaseMLPPallas:
    """Prepared (padded/cast-once) BaseMLP forward: y = MLP(factor * x)."""

    def __init__(self, weights, biases, factor=1.0, compute_dtype=jnp.bfloat16):
        self.num_layers = len(weights)
        self.dims, self.dims_pad, self.flat_params = prepare_params(
            weights, biases, factor=factor, compute_dtype=compute_dtype)
        self._fwd = jax.jit(partial(
            _forward_impl,
            num_layers=self.num_layers,
            dims=self.dims,
            dims_pad=self.dims_pad,
            compute_dtype=compute_dtype))

    def __call__(self, x):
        return self._fwd(x, *self.flat_params)


# --------------------------------------------------------------------------- reference / init

def init_params(key, in_dim, hidden_dim, out_dim, activation="relu"):
    """xavier_uniform_ (gain from calculate_gain) + zero biases, matching
    BaseMLP._init_weights. Weights returned as [d_in, d_out]."""
    gain = math.sqrt(2.0) if activation == "relu" else 1.0
    dims = [in_dim] + list(hidden_dim) + [out_dim]
    weights, biases = [], []
    for i in range(len(dims) - 1):
        d_in, d_out = dims[i], dims[i + 1]
        key, sub = jax.random.split(key)
        bound = gain * math.sqrt(6.0 / (d_in + d_out))
        w = jax.random.uniform(sub, (d_in, d_out), jnp.float32, -bound, bound)
        b = jnp.zeros((1, d_out), jnp.float32)
        weights.append(w)
        biases.append(b)
    return weights, biases


def reference_forward(x, weights, biases, factor):
    h = x * factor
    for i, (w, b) in enumerate(zip(weights, biases)):
        h = h @ w + b
        if i < len(weights) - 1:
            h = jnp.maximum(h, 0.0)
    return h


if __name__ == "__main__":
    key = jax.random.PRNGKey(0)

    # BaseMLP(in_dim=16, hidden_dim=[32, 32], out_dim=8, activation=nn.ReLU(),
    #         bias=True, factor=2.0)
    B, in_dim, hidden_dim, out_dim, factor = 16, 16, [32, 32], 8, 2.0

    k_x, k_p = jax.random.split(key)
    x = jax.random.normal(k_x, (B, in_dim), jnp.float32)
    weights, biases = init_params(k_p, in_dim, hidden_dim, out_dim, activation="relu")

    ref = reference_forward(x, weights, biases, factor)

    # f32 MXU-feed path (tight tolerance)
    mlp_f32 = BaseMLPPallas(weights, biases, factor=factor, compute_dtype=jnp.float32)
    out_f32 = jax.block_until_ready(mlp_f32(x))
    assert out_f32.shape == (B, out_dim)
    assert jnp.allclose(out_f32, ref, atol=1e-5, rtol=1e-5), "f32 mismatch vs reference"

    # default bf16 MXU-feed path (v6e/v7x-native), f32 accumulation -> loose tolerance
    mlp_bf16 = BaseMLPPallas(weights, biases, factor=factor)  # compute_dtype=bf16 default
    out_bf16 = jax.block_until_ready(mlp_bf16(x))
    assert out_bf16.shape == (B, out_dim)
    assert jnp.allclose(out_bf16, ref, atol=5e-2, rtol=5e-2), "bf16 mismatch vs reference"

    print("KERNEL_OK")
</pallas_src>

<mosaic_0001>
module attributes {stable_mosaic.version = 11 : i64} {
  func.func @_mlp_kernel(%arg0: i32, %arg1: memref<16x128xf32, #tpu.memory_space<vmem>>, %arg2: memref<128x128xf32, #tpu.memory_space<vmem>>, %arg3: memref<1x128xf32, #tpu.memory_space<vmem>>, %arg4: memref<128x128xf32, #tpu.memory_space<vmem>>, %arg5: memref<1x128xf32, #tpu.memory_space<vmem>>, %arg6: memref<128x128xf32, #tpu.memory_space<vmem>>, %arg7: memref<1x128xf32, #tpu.memory_space<vmem>>, %arg8: memref<16x128xf32, #tpu.memory_space<vmem>>) attributes {dimension_semantics = [#tpu.dimension_semantics<parallel>], iteration_bounds = array<i64: 1>, scalar_prefetch = 0 : i64, scratch_operands = 0 : i64, tpu.core_type = #tpu.core_type<tc>, window_params = [{transform_indices = @transform_0, window_bounds = array<i64: 16, 128>}, {pipeline_mode = #tpu.pipeline_mode<synchronous>, transform_indices = @transform_1, window_bounds = array<i64: 128, 128>}, {pipeline_mode = #tpu.pipeline_mode<synchronous>, transform_indices = @transform_2, window_bounds = array<i64: 1, 128>}, {pipeline_mode = #tpu.pipeline_mode<synchronous>, transform_indices = @transform_3, window_bounds = array<i64: 128, 128>}, {pipeline_mode = #tpu.pipeline_mode<synchronous>, transform_indices = @transform_4, window_bounds = array<i64: 1, 128>}, {pipeline_mode = #tpu.pipeline_mode<synchronous>, transform_indices = @transform_5, window_bounds = array<i64: 128, 128>}, {pipeline_mode = #tpu.pipeline_mode<synchronous>, transform_indices = @transform_6, window_bounds = array<i64: 1, 128>}, {transform_indices = @transform_7, window_bounds = array<i64: 16, 128>}]} {
    %c0 = arith.constant 0 : index
    %c0_0 = arith.constant 0 : index
    %0 = vector.load %arg1[%c0, %c0_0] : memref<16x128xf32, #tpu.memory_space<vmem>>, vector<16x128xf32>
    %c0_1 = arith.constant 0 : index
    %c0_2 = arith.constant 0 : index
    %1 = vector.load %arg2[%c0_1, %c0_2] : memref<128x128xf32, #tpu.memory_space<vmem>>, vector<128x128xf32>
    %c0_3 = arith.constant 0 : index
    %c0_4 = arith.constant 0 : index
    %2 = vector.load %arg3[%c0_3, %c0_4] : memref<1x128xf32, #tpu.memory_space<vmem>>, vector<1x128xf32>
    %cst = arith.constant dense<0.000000e+00> : vector<16x128xf32>
    %3 = tpu.matmul %0, %1, %cst {dimension_numbers = #tpu.dot_dimension_numbers<[1], [0], [0], [1], [0, 0, 1, 1], [], []>} : vector<16x128xf32>, vector<128x128xf32>, vector<16x128xf32> -> vector<16x128xf32>
    %4 = vector.broadcast %2 : vector<1x128xf32> to vector<16x128xf32>
    %5 = arith.addf %3, %4 : vector<16x128xf32>
    %cst_5 = arith.constant 0.000000e+00 : f32
    %6 = vector.broadcast %cst_5 : f32 to vector<16x128xf32>
    %7 = arith.maximumf %5, %6 : vector<16x128xf32>
    %c0_6 = arith.constant 0 : index
    %c0_7 = arith.constant 0 : index
    %8 = vector.load %arg4[%c0_6, %c0_7] : memref<128x128xf32, #tpu.memory_space<vmem>>, vector<128x128xf32>
    %c0_8 = arith.constant 0 : index
    %c0_9 = arith.constant 0 : index
    %9 = vector.load %arg5[%c0_8, %c0_9] : memref<1x128xf32, #tpu.memory_space<vmem>>, vector<1x128xf32>
    %cst_10 = arith.constant dense<0.000000e+00> : vector<16x128xf32>
    %10 = tpu.matmul %7, %8, %cst_10 {dimension_numbers = #tpu.dot_dimension_numbers<[1], [0], [0], [1], [0, 0, 1, 1], [], []>} : vector<16x128xf32>, vector<128x128xf32>, vector<16x128xf32> -> vector<16x128xf32>
    %11 = vector.broadcast %9 : vector<1x128xf32> to vector<16x128xf32>
    %12 = arith.addf %10, %11 : vector<16x128xf32>
    %cst_11 = arith.constant 0.000000e+00 : f32
    %13 = vector.broadcast %cst_11 : f32 to vector<16x128xf32>
    %14 = arith.maximumf %12, %13 : vector<16x128xf32>
    %c0_12 = arith.constant 0 : index
    %c0_13 = arith.constant 0 : index
    %15 = vector.load %arg6[%c0_12, %c0_13] : memref<128x128xf32, #tpu.memory_space<vmem>>, vector<128x128xf32>
    %c0_14 = arith.constant 0 : index
    %c0_15 = arith.constant 0 : index
    %16 = vector.load %arg7[%c0_14, %c0_15] : memref<1x128xf32, #tpu.memory_space<vmem>>, vector<1x128xf32>
    %cst_16 = arith.constant dense<0.000000e+00> : vector<16x128xf32>
    %17 = tpu.matmul %14, %15, %cst_16 {dimension_numbers = #tpu.dot_dimension_numbers<[1], [0], [0], [1], [0, 0, 1, 1], [], []>} : vector<16x128xf32>, vector<128x128xf32>, vector<16x128xf32> -> vector<16x128xf32>
    %18 = vector.broadcast %16 : vector<1x128xf32> to vector<16x128xf32>
    %19 = arith.addf %17, %18 : vector<16x128xf32>
    %c0_17 = arith.constant 0 : index
    %c0_18 = arith.constant 0 : index
    %20 = vector.load %arg8[%c0_17, %c0_18] : memref<16x128xf32, #tpu.memory_space<vmem>>, vector<16x128xf32>
    tpu.vector_store %arg8[%c0_17, %c0_18], %19 {strides = array<i32>} : memref<16x128xf32, #tpu.memory_space<vmem>>, vector<16x128xf32>,
    return
  }
  func.func @transform_0(%arg0: i32) -> (i32, i32) {
    %c0_i32 = arith.constant 0 : i32
    %c0_i32_0 = arith.constant 0 : i32
    return %arg0, %c0_i32 : i32, i32
  }
  func.func @transform_1(%arg0: i32) -> (i32, i32) {
    %c0_i32 = arith.constant 0 : i32
    %c0_i32_0 = arith.constant 0 : i32
    %c0_i32_1 = arith.constant 0 : i32
    return %c0_i32, %c0_i32_0 : i32, i32
  }
  func.func @transform_2(%arg0: i32) -> (i32, i32) {
    %c0_i32 = arith.constant 0 : i32
    %c0_i32_0 = arith.constant 0 : i32
    %c0_i32_1 = arith.constant 0 : i32
    return %c0_i32, %c0_i32_0 : i32, i32
  }
  func.func @transform_3(%arg0: i32) -> (i32, i32) {
    %c0_i32 = arith.constant 0 : i32
    %c0_i32_0 = arith.constant 0 : i32
    %c0_i32_1 = arith.constant 0 : i32
    return %c0_i32, %c0_i32_0 : i32, i32
  }
  func.func @transform_4(%arg0: i32) -> (i32, i32) {
    %c0_i32 = arith.constant 0 : i32
    %c0_i32_0 = arith.constant 0 : i32
    %c0_i32_1 = arith.constant 0 : i32
    return %c0_i32, %c0_i32_0 : i32, i32
  }
  func.func @transform_5(%arg0: i32) -> (i32, i32) {
    %c0_i32 = arith.constant 0 : i32
    %c0_i32_0 = arith.constant 0 : i32
    %c0_i32_1 = arith.constant 0 : i32
    return %c0_i32, %c0_i32_0 : i32, i32
  }
  func.func @transform_6(%arg0: i32) -> (i32, i32) {
    %c0_i32 = arith.constant 0 : i32
    %c0_i32_0 = arith.constant 0 : i32
    %c0_i32_1 = arith.constant 0 : i32
    return %c0_i32, %c0_i32_0 : i32, i32
  }
  func.func @transform_7(%arg0: i32) -> (i32, i32) {
    %c0_i32 = arith.constant 0 : i32
    %c0_i32_0 = arith.constant 0 : i32
    return %arg0, %c0_i32 : i32, i32
  }
}

</mosaic_0001>

<llo_original>
// kernel: _forward_impl.1
$region0: #{_forward_impl.1}
  #allocation0 [shape = 'u32[]', space=smem, size = 0x4, offset = 0x4, fixed_abs, tag = 'smem constant byte address 0x4 - core index']
  #allocation1 [shape = 'u32[144,128]{1,0:T(1,128)}', space=vmem, size = 0x12000, scoped, tag = 'internal scratch']
  %s0 = inlined_call_operand.vmem [shape: f32[16,128], index: 0, kind: input, shape index: {}]
  %s1 = inlined_call_operand.hbm [shape: f32[128,128], index: 1, kind: input, shape index: {}]
  %s2 = inlined_call_operand.vmem [shape: f32[1,128], index: 2, kind: input, shape index: {}]
  %s3 = inlined_call_operand.hbm [shape: f32[128,128], index: 3, kind: input, shape index: {}]
  %s4 = inlined_call_operand.vmem [shape: f32[1,128], index: 4, kind: input, shape index: {}]
  %s5 = inlined_call_operand.hbm [shape: f32[128,128], index: 5, kind: input, shape index: {}]
  %s6 = inlined_call_operand.vmem [shape: f32[1,128], index: 6, kind: input, shape index: {}]
  %s7 = inlined_call_operand.vmem [shape: f32[16,128], index: 7, kind: output, shape index: {}]
  %s8 = sld [smem:[#allocation0]]
  $region50: #{_forward_impl.1} parent=0
    _
  %s10 = ssub.s32 1, %s8
  %s11 = scalar_select 0, %s10, %s8
  $region1: #{_forward_impl.1} parent=0
    #allocation2 [shape = 'u8[65536]{0}', space=vmem, size = 0x10000, scoped, tag = 'input window, operand 1, single buffered']
    #allocation3 [shape = 's32[1]{0}', space=sflag, size = 0x4, scoped, tag = 'scoped memory for _forward_impl.1']
    #allocation4 [shape = 'u8[65536]{0}', space=vmem, size = 0x10000, scoped, tag = 'input window, operand 3, single buffered']
    #allocation5 [shape = 's32[1]{0}', space=sflag, size = 0x4, scoped, tag = 'scoped memory for _forward_impl.1']
    #allocation6 [shape = 'u8[65536]{0}', space=vmem, size = 0x10000, scoped, tag = 'input window, operand 5, single buffered']
    %12 = vsyncpa [#allocation3], 0
    %13 = vsyncpa [#allocation5], 0
    // Predicated region
    $region2: #{_forward_impl.1} parent=1 // pred_check
      _
    $region3: #{_forward_impl.1} parent=1 // pred_check_branch
      %15 = sbr.rel (0) target = $region5
    $region4: #{_forward_impl.1} parent=1 // pred_region
      _
    $region5: #{_forward_impl.1} parent=1 // pred_fallthru
      _
    // Predicated region
    $region6: #{_forward_impl.1} parent=1 // pred_check
      _
    $region7: #{_forward_impl.1} parent=1 // pred_check_branch
      %17 = sbr.rel (0) target = $region9
    $region8: #{_forward_impl.1} parent=1 // pred_region
      %s19 = ssub.s32 2048, 2048
      %20 = vsyncadd [#allocation3], %s19
      %s21 = sshll.u32 [#allocation2], 4
      %s22 = int_to_ptr.vmem [resolvable:$true] %s21
      %27 = dma.hbm_to_vmem [thread:$0]  %s1, 2048, %s22, [#allocation3], 128, 128, 8
    $region9: #{_forward_impl.1} parent=1 // pred_fallthru
      _
    // Predicated region
    $region10: #{_forward_impl.1} parent=1 // pred_check
      _
    $region11: #{_forward_impl.1} parent=1 // pred_check_branch
      %29 = sbr.rel (0) target = $region13
    $region12: #{_forward_impl.1} parent=1 // pred_region
      _
    $region13: #{_forward_impl.1} parent=1 // pred_fallthru
      _
    // Predicated region
    $region14: #{_forward_impl.1} parent=1 // pred_check
      _
    $region15: #{_forward_impl.1} parent=1 // pred_check_branch
      %31 = sbr.rel (0) target = $region17
    $region16: #{_forward_impl.1} parent=1 // pred_region
      %s33 = ssub.s32 2048, 2048
      %34 = vsyncadd [#allocation5], %s33
      %s35 = sshll.u32 [#allocation4], 4
      %s36 = int_to_ptr.vmem [resolvable:$true] %s35
      %41 = dma.hbm_to_vmem [thread:$0]  %s3, 2048, %s36, [#allocation5], 128, 128, 8
    $region17: #{_forward_impl.1} parent=1 // pred_fallthru
      _
    // Predicated region
    $region18: #{_forward_impl.1} parent=1 // pred_check
      _
    $region19: #{_forward_impl.1} parent=1 // pred_check_branch
      %43 = sbr.rel (0) target = $region21
    $region20: #{_forward_impl.1} parent=1 // pred_region
      _
    $region21: #{_forward_impl.1} parent=1 // pred_fallthru
      _
    // Predicated region
    $region22: #{_forward_impl.1} parent=1 // pred_check
      _
    $region23: #{_forward_impl.1} parent=1 // pred_check_branch
      %45 = sbr.rel (0) target = $region25
    $region24: #{_forward_impl.1} parent=1 // pred_region
      %s47 = ssub.s32 2048, 2048
      %48 = vsyncadd [#allocation5], %s47
      %s49 = sshll.u32 [#allocation6], 4
      %s50 = int_to_ptr.vmem [resolvable:$true] %s49
      %55 = dma.hbm_to_vmem [thread:$0]  %s5, 2048, %s50, [#allocation5], 128, 128, 8
    $region25: #{_forward_impl.1} parent=1 // pred_fallthru
      _
    // Predicated region
    $region26: #{_forward_impl.1} parent=1 // pred_check
      _
    $region27: #{_forward_impl.1} parent=1 // pred_check_branch
      %57 = sbr.rel (0) target = $region29
    $region28: #{_forward_impl.1} parent=1 // pred_region
      _
    $region29: #{_forward_impl.1} parent=1 // pred_fallthru
      _
    // Predicated region
    $region30: #{_forward_impl.1} parent=1 // pred_check
      _
    $region31: #{_forward_impl.1} parent=1 // pred_check_branch
      %59 = sbr.rel (0) target = $region33
    $region32: #{_forward_impl.1} parent=1 // pred_region
      %60 = dma.done [#allocation3], 2048
    $region33: #{_forward_impl.1} parent=1 // pred_fallthru
      _
    // Predicated region
    $region34: #{_forward_impl.1} parent=1 // pred_check
      _
    $region35: #{_forward_impl.1} parent=1 // pred_check_branch
      %62 = sbr.rel (0) target = $region37
    $region36: #{_forward_impl.1} parent=1 // pred_region
      %63 = dma.done [#allocation5], 2048
    $region37: #{_forward_impl.1} parent=1 // pred_fallthru
      _
    // Predicated region
    $region38: #{_forward_impl.1} parent=1 // pred_check
      _
    $region39: #{_forward_impl.1} parent=1 // pred_check_branch
      %65 = sbr.rel (0) target = $region41
    $region40: #{_forward_impl.1} parent=1 // pred_region
      %66 = dma.done [#allocation5], 2048
    $region41: #{_forward_impl.1} parent=1 // pred_fallthru
      _
    %v67 = vld [vmem:[%s0] sm:$0xff]
    %v68 = vld [vmem:[%s0 + $0x8] sm:$0xff]
    %v69 = vld [vmem:[#allocation2] sm:$0xff]
    %v70 = vld [vmem:[#allocation2 + $0x8] sm:$0xff]
    %v71 = vld [vmem:[#allocation2 + $0x10] sm:$0xff]
    %v72 = vld [vmem:[#allocation2 + $0x18] sm:$0xff]
    %v73 = vld [vmem:[#allocation2 + $0x20] sm:$0xff]
    %v74 = vld [vmem:[#allocation2 + $0x28] sm:$0xff]
    %v75 = vld [vmem:[#allocation2 + $0x30] sm:$0xff]
    %v76 = vld [vmem:[#allocation2 + $0x38] sm:$0xff]
    %v77 = vld [vmem:[#allocation2 + $0x40] sm:$0xff]
    %v78 = vld [vmem:[#allocation2 + $0x48] sm:$0xff]
    %v79 = vld [vmem:[#allocation2 + $0x50] sm:$0xff]
    %v80 = vld [vmem:[#allocation2 + $0x58] sm:$0xff]
    %v81 = vld [vmem:[#allocation2 + $0x60] sm:$0xff]
    %v82 = vld [vmem:[#allocation2 + $0x68] sm:$0xff]
    %v83 = vld [vmem:[#allocation2 + $0x70] sm:$0xff]
    %v84 = vld [vmem:[#allocation2 + $0x78] sm:$0xff]
    %v85 = vld [vmem:[%s2] sm:$0x1]
    %v87 = vlaneseq
    %v88 = vshrl.u32 %v87, 7
    %v89 = vsub.s32 0, %v88
    %v90 = vrot.slane %v85, %v89
    %92 = vmatprep.subr.mxu0 0.0
    %93 = vmatpush1.msra.mxu0 %v84
    %94 = vmatprep.subr.mxu0 0.0
    %95 = vmatpush1.msra.mxu0 %v83
    %96 = vmatprep.subr.mxu0 0.0
    %97 = vmatpush1.msra.mxu0 %v82
    %98 = vmatprep.subr.mxu0 0.0
    %99 = vmatpush1.msra.mxu0 %v81
    %100 = vmatprep.subr.mxu0 0.0
    %101 = vmatpush1.msra.mxu0 %v80
    %102 = vmatprep.subr.mxu0 0.0
    %103 = vmatpush1.msra.mxu0 %v79
    %104 = vmatprep.subr.mxu0 0.0
    %105 = vmatpush1.msra.mxu0 %v78
    %106 = vmatprep.subr.mxu0 0.0
    %107 = vmatpush1.msra.mxu0 %v77
    %108 = vmatprep.subr.mxu0 0.0
    %109 = vmatpush1.msra.mxu0 %v76
    %110 = vmatprep.subr.mxu0 0.0
    %111 = vmatpush1.msra.mxu0 %v75
    %112 = vmatprep.subr.mxu0 0.0
    %113 = vmatpush1.msra.mxu0 %v74
    %114 = vmatprep.subr.mxu0 0.0
    %115 = vmatpush1.msra.mxu0 %v73
    %116 = vmatprep.subr.mxu0 0.0
    %117 = vmatpush1.msra.mxu0 %v72
    %118 = vmatprep.subr.mxu0 0.0
    %119 = vmatpush1.msra.mxu0 %v71
    %120 = vmatprep.subr.mxu0 0.0
    %121 = vmatpush1.msra.mxu0 %v70
    %122 = vmatprep.subr.mxu0 0.0
    %123 = vmatpush1.msra.mxu0 %v69
    %124 = vmatprep.subr.mxu0 0.0
    %125 = vmatpush2.msra.mxu0 0.0
    %126 = vmatprep.subr.mxu0 0.0
    %127 = vmatpush2.msra.mxu0 0.0
    %128 = vmatprep.subr.mxu0 0.0
    %129 = vmatpush2.msra.mxu0 0.0
    %130 = vmatprep.subr.mxu0 0.0
    %131 = vmatpush2.msra.mxu0 0.0
    %132 = vmatprep.subr.mxu0 0.0
    %133 = vmatpush2.msra.mxu0 0.0
    %134 = vmatprep.subr.mxu0 0.0
    %135 = vmatpush2.msra.mxu0 0.0
    %136 = vmatprep.subr.mxu0 0.0
    %137 = vmatpush2.msra.mxu0 0.0
    %138 = vmatprep.subr.mxu0 0.0
    %139 = vmatpush2.msra.mxu0 0.0
    %140 = vmatprep.subr.mxu0 0.0
    %141 = vmatpush2.msra.mxu0 0.0
    %142 = vmatprep.subr.mxu0 0.0
    %143 = vmatpush2.msra.mxu0 0.0
    %144 = vmatprep.subr.mxu0 0.0
    %145 = vmatpush2.msra.mxu0 0.0
    %146 = vmatprep.subr.mxu0 0.0
    %147 = vmatpush2.msra.mxu0 0.0
    %148 = vmatprep.subr.mxu0 0.0
    %149 = vmatpush2.msra.mxu0 0.0
    %150 = vmatprep.subr.mxu0 0.0
    %151 = vmatpush2.msra.mxu0 0.0
    %152 = vmatprep.subr.mxu0 0.0
    %153 = vmatpush2.msra.mxu0 0.0
    %154 = vmatprep.subr.mxu0 0.0
    %155 = vmatpush2.msra.mxu0 0.0
    %156 = vmatprep.mubr.f32.mxu0 0.0
    %157 = vmatmul.mubr.f32.gmra.mxu0 %v67
    %v158 = vpop.f32.mrf.mxu0
    %v159 = vadd.f32 %v90, %v158
    %v160 = vpop.f32.mrf.mxu0
    %161 = vmatprep.mubr.f32.mxu0 0.0
    %162 = vmatmul.mubr.f32.gmra.mxu0 %v68
    %v163 = vpop.f32.mrf.mxu0
    %v164 = vadd.f32 %v90, %v163
    %v165 = vpop.f32.mrf.mxu0
    %166 = vdwg.mxu0
    %v167 = vmax.f32 %v159, 0.0
    %v168 = vmax.f32 %v164, 0.0
    %v169 = vld [vmem:[#allocation4] sm:$0xff]
    %v170 = vld [vmem:[#allocation4 + $0x8] sm:$0xff]
    %v171 = vld [vmem:[#allocation4 + $0x10] sm:$0xff]
    %v172 = vld [vmem:[#allocation4 + $0x18] sm:$0xff]
    %v173 = vld [vmem:[#allocation4 + $0x20] sm:$0xff]
    %v174 = vld [vmem:[#allocation4 + $0x28] sm:$0xff]
    %v175 = vld [vmem:[#allocation4 + $0x30] sm:$0xff]
    %v176 = vld [vmem:[#allocation4 + $0x38] sm:$0xff]
    %v177 = vld [vmem:[#allocation4 + $0x40] sm:$0xff]
    %v178 = vld [vmem:[#allocation4 + $0x48] sm:$0xff]
    %v179 = vld [vmem:[#allocation4 + $0x50] sm:$0xff]
    %v180 = vld [vmem:[#allocation4 + $0x58] sm:$0xff]
    %v181 = vld [vmem:[#allocation4 + $0x60] sm:$0xff]
    %v182 = vld [vmem:[#allocation4 + $0x68] sm:$0xff]
    %v183 = vld [vmem:[#allocation4 + $0x70] sm:$0xff]
    %v184 = vld [vmem:[#allocation4 + $0x78] sm:$0xff]
    %v185 = vld [vmem:[%s4] sm:$0x1]
    %v187 = vlaneseq
    %v188 = vshrl.u32 %v187, 7
    %v189 = vsub.s32 0, %v188
    %v190 = vrot.slane %v185, %v189
    %192 = vmatprep.subr.mxu0 0.0
    %193 = vmatpush1.msra.mxu0 %v184
    %194 = vmatprep.subr.mxu0 0.0
    %195 = vmatpush1.msra.mxu0 %v183
    %196 = vmatprep.subr.mxu0 0.0
    %197 = vmatpush1.msra.mxu0 %v182
    %198 = vmatprep.subr.mxu0 0.0
    %199 = vmatpush1.msra.mxu0 %v181
    %200 = vmatprep.subr.mxu0 0.0
    %201 = vmatpush1.msra.mxu0 %v180
    %202 = vmatprep.subr.mxu0 0.0
    %203 = vmatpush1.msra.mxu0 %v179
    %204 = vmatprep.subr.mxu0 0.0
    %205 = vmatpush1.msra.mxu0 %v178
    %206 = vmatprep.subr.mxu0 0.0
    %207 = vmatpush1.msra.mxu0 %v177
    %208 = vmatprep.subr.mxu0 0.0
    %209 = vmatpush1.msra.mxu0 %v176
    %210 = vmatprep.subr.mxu0 0.0
    %211 = vmatpush1.msra.mxu0 %v175
    %212 = vmatprep.subr.mxu0 0.0
    %213 = vmatpush1.msra.mxu0 %v174
    %214 = vmatprep.subr.mxu0 0.0
    %215 = vmatpush1.msra.mxu0 %v173
    %216 = vmatprep.subr.mxu0 0.0
    %217 = vmatpush1.msra.mxu0 %v172
    %218 = vmatprep.subr.mxu0 0.0
    %219 = vmatpush1.msra.mxu0 %v171
    %220 = vmatprep.subr.mxu0 0.0
    %221 = vmatpush1.msra.mxu0 %v170
    %222 = vmatprep.subr.mxu0 0.0
    %223 = vmatpush1.msra.mxu0 %v169
    %224 = vmatprep.subr.mxu0 0.0
    %225 = vmatpush2.msra.mxu0 0.0
    %226 = vmatprep.subr.mxu0 0.0
    %227 = vmatpush2.msra.mxu0 0.0
    %228 = vmatprep.subr.mxu0 0.0
    %229 = vmatpush2.msra.mxu0 0.0
    %230 = vmatprep.subr.mxu0 0.0
    %231 = vmatpush2.msra.mxu0 0.0
    %232 = vmatprep.subr.mxu0 0.0
    %233 = vmatpush2.msra.mxu0 0.0
    %234 = vmatprep.subr.mxu0 0.0
    %235 = vmatpush2.msra.mxu0 0.0
    %236 = vmatprep.subr.mxu0 0.0
    %237 = vmatpush2.msra.mxu0 0.0
    %238 = vmatprep.subr.mxu0 0.0
    %239 = vmatpush2.msra.mxu0 0.0
    %240 = vmatprep.subr.mxu0 0.0
    %241 = vmatpush2.msra.mxu0 0.0
    %242 = vmatprep.subr.mxu0 0.0
    %243 = vmatpush2.msra.mxu0 0.0
    %244 = vmatprep.subr.mxu0 0.0
    %245 = vmatpush2.msra.mxu0 0.0
    %246 = vmatprep.subr.mxu0 0.0
    %247 = vmatpush2.msra.mxu0 0.0
    %248 = vmatprep.subr.mxu0 0.0
    %249 = vmatpush2.msra.mxu0 0.0
    %250 = vmatprep.subr.mxu0 0.0
    %251 = vmatpush2.msra.mxu0 0.0
    %252 = vmatprep.subr.mxu0 0.0
    %253 = vmatpush2.msra.mxu0 0.0
    %254 = vmatprep.subr.mxu0 0.0
    %255 = vmatpush2.msra.mxu0 0.0
    %256 = vmatprep.mubr.f32.mxu0 0.0
    %257 = vmatmul.mubr.f32.gmra.mxu0 %v167
    %v258 = vpop.f32.mrf.mxu0
    %v259 = vadd.f32 %v190, %v258
    %v260 = vpop.f32.mrf.mxu0
    %261 = vmatprep.mubr.f32.mxu0 0.0
    %262 = vmatmul.mubr.f32.gmra.mxu0 %v168
    %v263 = vpop.f32.mrf.mxu0
    %v264 = vadd.f32 %v190, %v263
    %v265 = vpop.f32.mrf.mxu0
    %266 = vdwg.mxu0
    %v267 = vmax.f32 %v259, 0.0
    %v268 = vmax.f32 %v264, 0.0
    %v269 = vld [vmem:[#allocation6] sm:$0xff]
    %v270 = vld [vmem:[#allocation6 + $0x8] sm:$0xff]
    %v271 = vld [vmem:[#allocation6 + $0x10] sm:$0xff]
    %v272 = vld [vmem:[#allocation6 + $0x18] sm:$0xff]
    %v273 = vld [vmem:[#allocation6 + $0x20] sm:$0xff]
    %v274 = vld [vmem:[#allocation6 + $0x28] sm:$0xff]
    %v275 = vld [vmem:[#allocation6 + $0x30] sm:$0xff]
    %v276 = vld [vmem:[#allocation6 + $0x38] sm:$0xff]
    %v277 = vld [vmem:[#allocation6 + $0x40] sm:$0xff]
    %v278 = vld [vmem:[#allocation6 + $0x48] sm:$0xff]
    %v279 = vld [vmem:[#allocation6 + $0x50] sm:$0xff]
    %v280 = vld [vmem:[#allocation6 + $0x58] sm:$0xff]
    %v281 = vld [vmem:[#allocation6 + $0x60] sm:$0xff]
    %v282 = vld [vmem:[#allocation6 + $0x68] sm:$0xff]
    %v283 = vld [vmem:[#allocation6 + $0x70] sm:$0xff]
    %v284 = vld [vmem:[#allocation6 + $0x78] sm:$0xff]
    %v285 = vld [vmem:[%s6] sm:$0x1]
    %v287 = vlaneseq
    %v288 = vshrl.u32 %v287, 7
    %v289 = vsub.s32 0, %v288
    %v290 = vrot.slane %v285, %v289
    %292 = vmatprep.subr.mxu0 0.0
    %293 = vmatpush1.msra.mxu0 %v284
    %294 = vmatprep.subr.mxu0 0.0
    %295 = vmatpush1.msra.mxu0 %v283
    %296 = vmatprep.subr.mxu0 0.0
    %297 = vmatpush1.msra.mxu0 %v282
    %298 = vmatprep.subr.mxu0 0.0
    %299 = vmatpush1.msra.mxu0 %v281
    %300 = vmatprep.subr.mxu0 0.0
    %301 = vmatpush1.msra.mxu0 %v280
    %302 = vmatprep.subr.mxu0 0.0
    %303 = vmatpush1.msra.mxu0 %v279
    %304 = vmatprep.subr.mxu0 0.0
    %305 = vmatpush1.msra.mxu0 %v278
    %306 = vmatprep.subr.mxu0 0.0
    %307 = vmatpush1.msra.mxu0 %v277
    %308 = vmatprep.subr.mxu0 0.0
    %309 = vmatpush1.msra.mxu0 %v276
    %310 = vmatprep.subr.mxu0 0.0
    %311 = vmatpush1.msra.mxu0 %v275
    %312 = vmatprep.subr.mxu0 0.0
    %313 = vmatpush1.msra.mxu0 %v274
    %314 = vmatprep.subr.mxu0 0.0
    %315 = vmatpush1.msra.mxu0 %v273
    %316 = vmatprep.subr.mxu0 0.0
    %317 = vmatpush1.msra.mxu0 %v272
    %318 = vmatprep.subr.mxu0 0.0
    %319 = vmatpush1.msra.mxu0 %v271
    %320 = vmatprep.subr.mxu0 0.0
    %321 = vmatpush1.msra.mxu0 %v270
    %322 = vmatprep.subr.mxu0 0.0
    %323 = vmatpush1.msra.mxu0 %v269
    %324 = vmatprep.subr.mxu0 0.0
    %325 = vmatpush2.msra.mxu0 0.0
    %326 = vmatprep.subr.mxu0 0.0
    %327 = vmatpush2.msra.mxu0 0.0
    %328 = vmatprep.subr.mxu0 0.0
    %329 = vmatpush2.msra.mxu0 0.0
    %330 = vmatprep.subr.mxu0 0.0
    %331 = vmatpush2.msra.mxu0 0.0
    %332 = vmatprep.subr.mxu0 0.0
    %333 = vmatpush2.msra.mxu0 0.0
    %334 = vmatprep.subr.mxu0 0.0
    %335 = vmatpush2.msra.mxu0 0.0
    %336 = vmatprep.subr.mxu0 0.0
    %337 = vmatpush2.msra.mxu0 0.0
    %338 = vmatprep.subr.mxu0 0.0
    %339 = vmatpush2.msra.mxu0 0.0
    %340 = vmatprep.subr.mxu0 0.0
    %341 = vmatpush2.msra.mxu0 0.0
    %342 = vmatprep.subr.mxu0 0.0
    %343 = vmatpush2.msra.mxu0 0.0
    %344 = vmatprep.subr.mxu0 0.0
    %345 = vmatpush2.msra.mxu0 0.0
    %346 = vmatprep.subr.mxu0 0.0
    %347 = vmatpush2.msra.mxu0 0.0
    %348 = vmatprep.subr.mxu0 0.0
    %349 = vmatpush2.msra.mxu0 0.0
    %350 = vmatprep.subr.mxu0 0.0
    %351 = vmatpush2.msra.mxu0 0.0
    %352 = vmatprep.subr.mxu0 0.0
    %353 = vmatpush2.msra.mxu0 0.0
    %354 = vmatprep.subr.mxu0 0.0
    %355 = vmatpush2.msra.mxu0 0.0
    %356 = vmatprep.mubr.f32.mxu0 0.0
    %357 = vmatmul.mubr.f32.gmra.mxu0 %v267
    %v358 = vpop.f32.mrf.mxu0
    %v359 = vadd.f32 %v290, %v358
    %v360 = vpop.f32.mrf.mxu0
    %361 = vmatprep.mubr.f32.mxu0 0.0
    %362 = vmatmul.mubr.f32.gmra.mxu0 %v268
    %v363 = vpop.f32.mrf.mxu0
    %v364 = vadd.f32 %v290, %v363
    %v365 = vpop.f32.mrf.mxu0
    %366 = vdwg.mxu0
    %367 = vst [vmem:[%s7] sm:$0xff] %v359
    %368 = vst [vmem:[%s7 + $0x8] sm:$0xff] %v364
    // Predicated region
    $region42: #{_forward_impl.1} parent=1 // pred_check
      _
    $region43: #{_forward_impl.1} parent=1 // pred_check_branch
      %370 = sbr.rel (0) target = $region45
    $region44: #{_forward_impl.1} parent=1 // pred_region
      _
    $region45: #{_forward_impl.1} parent=1 // pred_fallthru
      _
    // Predicated region
    $region46: #{_forward_impl.1} parent=1 // pred_check
      _
    $region47: #{_forward_impl.1} parent=1 // pred_check_branch
      %372 = sbr.rel (0) target = $region49
    $region48: #{_forward_impl.1} parent=1 // pred_region
      _
    $region49: #{_forward_impl.1} parent=1 // pred_fallthru
      _
    %373 = vsyncpa [#allocation3], 1
    %374 = vsyncpa [#allocation5], 1

</llo_original>
